<compile_context>
chip_gen: v7x
topology: tpu7x:2x2x1
jax: 0.10.0
libtpu: 0.0.40
codegen_flags: <defaults>
</compile_context>

<pallas_src>
import math

import jax
import jax.numpy as jnp
from jax.experimental import pallas as pl
from jax.experimental.pallas import tpu as pltpu


def _round_up(x, m):
    return (x + m - 1) // m * m


def _cdiv(a, b):
    return (a + b - 1) // b


def _tpu_generation():
    try:
        kind = jax.devices()[0].device_kind.lower()
    except Exception:
        return "unknown"
    if "v5" in kind:
        return "v5e"
    if "v6" in kind:
        return "v6e"
    if "v7" in kind or "7x" in kind:
        return "v7x"
    return "unknown"


def _gen_defaults(gen):
    """Returns (tile_m, tile_h, tile_n, vmem_cap_bytes, tile_m_alignment)."""
    if gen == "v6e":
        # 918 TF/s bf16 vs ~1.4 TB/s HBM -> need ~700 FLOPs per weight byte.
        return 1024, 1024, 4096, 100 << 20, 256
    if gen == "v5e":
        # 197 TF/s vs ~0.82 TB/s -> ~240 FLOPs/byte; 512 gives 2x margin.
        return 512, 1024, 4096, 100 << 20, 128
    if gen == "v7x":
        # ~996 TF/s/TC vs ~3.2 TB/s -> ~310 FLOPs/byte; only 64 MiB VMEM.
        return 512, 1024, 2048, 40 << 20, 128
    return 512, 1024, 2048, 40 << 20, 128


# --------------------------------------------------------------------------------------
# Kernels
# --------------------------------------------------------------------------------------

def _mlp_kernel_resident(x_ref, w1_ref, b1_ref, w2_ref, b2_ref, o_ref):
    # Weights live whole in VMEM (constant index_maps); one shot per M-tile.
    x = x_ref[...].astype(w1_ref.dtype)
    h = jnp.dot(x, w1_ref[...], preferred_element_type=jnp.float32)
    h = jnp.maximum(h + b1_ref[...], 0.0)
    # TODO(synk): dropout has p=0.0 in the reference module -> identity; no RNG needed.
    y = jnp.dot(h.astype(w2_ref.dtype), w2_ref[...],
                preferred_element_type=jnp.float32)
    o_ref[...] = (y + b2_ref[...]).astype(o_ref.dtype)


def _mlp_kernel_stream(x_ref, w1_ref, b1_ref, w2_ref, b2_ref, o_ref, acc_ref):
    # Grid = (m, n, k); k (hidden) is the reduction axis into the f32 accumulator.
    k = pl.program_id(2)
    last = pl.num_programs(2) - 1

    @pl.when(k == 0)
    def _init():
        # Fold the fc2 bias into the accumulator init.
        acc_ref[...] = jnp.broadcast_to(b2_ref[...], acc_ref.shape)

    x = x_ref[...].astype(w1_ref.dtype)
    h = jnp.dot(x, w1_ref[...], preferred_element_type=jnp.float32)
    h = jnp.maximum(h + b1_ref[...], 0.0)
    c = jnp.dot(h.astype(w2_ref.dtype), w2_ref[...],
                preferred_element_type=jnp.float32)

    @pl.when(k < last)
    def _acc():
        acc_ref[...] += c

    @pl.when(k == last)
    def _fin():
        # Fused final step: skip the last accumulator read-modify-write.
        o_ref[...] = (acc_ref[...] + c).astype(o_ref.dtype)


# --------------------------------------------------------------------------------------
# Wrapper
# --------------------------------------------------------------------------------------

def mlp_transformer(x, w1, b1, w2, b2, *, tile_m=None, tile_h=None, tile_n=None,
                    compute_dtype=jnp.bfloat16, weight_resident=None):
    """x: (B, S, in_dim). w1: (in_dim, h_dim). w2: (h_dim, out_dim). Biases 1-D."""
    B, S, in_dim = x.shape
    h_dim = w1.shape[1]
    out_dim = w2.shape[1]
    out_dtype = x.dtype
    M = B * S

    gen = _tpu_generation()
    d_tm, d_th, d_tn, vmem_cap, tm_align = _gen_defaults(gen)
    tile_m = d_tm if tile_m is None else tile_m
    tile_h = d_th if tile_h is None else tile_h
    tile_n = d_tn if tile_n is None else tile_n

    cd = jnp.dtype(compute_dtype).itemsize
    xd = jnp.dtype(x.dtype).itemsize
    od = jnp.dtype(out_dtype).itemsize

    # ---- M tiling (MXU aligned; shrink for tiny inputs) ----
    if M >= tile_m:
        tile_m = _round_up(tile_m, tm_align)
    else:
        tile_m = _round_up(M, 16)
    # v7x: keep >= 2 M-tiles so the "parallel" axis can shard across both TensorCores.
    if gen == "v7x" and tile_m >= 256 and _cdiv(M, tile_m) < 2 and M > 128:
        tile_m = _round_up(tile_m // 2, 128)
    m_pad = _round_up(M, tile_m)

    out_pad = _round_up(out_dim, 128)   # lane-dense output stores
    h_full = _round_up(h_dim, 128)

    # ---- weight-resident feasibility (weights DMA'd once; only x/out stream) ----
    est_resident = (
        2 * tile_m * in_dim * xd            # x tile (native dtype), double-buffered
        + 2 * in_dim * h_full * cd          # w1 (conservatively budget 2 buffers)
        + 2 * h_full * out_pad * cd         # w2
        + 2 * h_full * 4 + 2 * out_pad * 4  # biases (f32)
        + 2 * tile_m * out_pad * od         # out tile
        + tile_m * in_dim * cd              # in-kernel cast copy of x
        + tile_m * h_full * (4 + cd)        # hidden intermediate (f32 + cast copy)
        + tile_m * out_pad * 4)             # f32 fc2 result before cast
    if weight_resident is None:
        weight_resident = est_resident <= vmem_cap

    # ---- streaming-path tile shrinking (graceful degradation instead of VMEM OOM) ----
    if not weight_resident:
        tile_h = min(_round_up(tile_h, 128), h_full)
        tile_n = min(_round_up(tile_n, 128), out_pad)

        def _est(tm, th, tn):
            return (2 * tm * in_dim * xd
                    + 2 * in_dim * th * cd
                    + 2 * th * tn * cd
                    + 2 * th * 4 + 2 * tn * 4
                    + 2 * tm * tn * od
                    + tm * tn * 4            # accumulator scratch
                    + tm * in_dim * cd       # in-kernel cast copy of x
                    + tm * th * (4 + cd))    # hidden intermediate (f32 + cast copy)

        while _est(tile_m, tile_h, tile_n) > vmem_cap:
            if tile_n > 256:
                tile_n = _round_up(tile_n // 2, 128)
            elif tile_h > 256:
                tile_h = _round_up(tile_h // 2, 128)
            elif tile_m > 128:
                tile_m = _round_up(tile_m // 2, 128)
            else:
                # TODO(synk): in_dim is untiled; absurdly large in_dim may still not fit.
                break
        m_pad = _round_up(M, tile_m)
        h_pad = _round_up(h_dim, tile_h)
        n_pad = _round_up(out_dim, tile_n)
    else:
        h_pad, n_pad = h_full, out_pad

    # ---- pad / cast operands (zero padding is semantics-preserving here) ----
    # x stays in its native dtype; cast happens inside the kernel (no extra HBM pass).
    x2d = x.reshape(M, in_dim)
    if m_pad != M:
        x2d = jnp.pad(x2d, ((0, m_pad - M), (0, 0)))

    w1c = w1.astype(compute_dtype)
    w2c = w2.astype(compute_dtype)
    b1f = b1.astype(jnp.float32).reshape(1, h_dim)
    b2f = b2.astype(jnp.float32).reshape(1, out_dim)
    if h_pad != h_dim:
        w1c = jnp.pad(w1c, ((0, 0), (0, h_pad - h_dim)))
        b1f = jnp.pad(b1f, ((0, 0), (0, h_pad - h_dim)))
        w2c = jnp.pad(w2c, ((0, h_pad - h_dim), (0, 0)))
    if n_pad != out_dim:
        w2c = jnp.pad(w2c, ((0, 0), (0, n_pad - out_dim)))
        b2f = jnp.pad(b2f, ((0, 0), (0, n_pad - out_dim)))

    flops = 2 * M * (in_dim * h_dim + h_dim * out_dim)

    if weight_resident:
        grid = (m_pad // tile_m,)
        kernel = _mlp_kernel_resident
        in_specs = [
            pl.BlockSpec((tile_m, in_dim), lambda i: (i, 0)),
            pl.BlockSpec((in_dim, h_pad), lambda i: (0, 0)),
            pl.BlockSpec((1, h_pad), lambda i: (0, 0)),
            pl.BlockSpec((h_pad, n_pad), lambda i: (0, 0)),
            pl.BlockSpec((1, n_pad), lambda i: (0, 0)),
        ]
        out_specs = pl.BlockSpec((tile_m, n_pad), lambda i: (i, 0))
        scratch = []
        dims = ("parallel",)
        bytes_accessed = (x2d.size * xd + w1c.size * cd + w2c.size * cd
                          + b1f.size * 4 + b2f.size * 4 + m_pad * n_pad * od)
    else:
        grid = (m_pad // tile_m, n_pad // tile_n, h_pad // tile_h)
        kernel = _mlp_kernel_stream
        in_specs = [
            pl.BlockSpec((tile_m, in_dim), lambda i, n, k: (i, 0)),
            pl.BlockSpec((in_dim, tile_h), lambda i, n, k: (0, k)),
            pl.BlockSpec((1, tile_h), lambda i, n, k: (0, k)),
            pl.BlockSpec((tile_h, tile_n), lambda i, n, k: (k, n)),
            pl.BlockSpec((1, tile_n), lambda i, n, k: (0, n)),
        ]
        out_specs = pl.BlockSpec((tile_m, tile_n), lambda i, n, k: (i, n))
        scratch = [pltpu.VMEM((tile_m, tile_n), jnp.float32)]
        dims = ("parallel", "parallel", "arbitrary")
        m_tiles, n_tiles = grid[0], grid[1]
        # Truthful streaming traffic: w1/b1 re-read per (M-tile, N-tile), w2/b2 per M-tile.
        bytes_accessed = (x2d.size * xd
                          + m_tiles * n_tiles * (w1c.size * cd + b1f.size * 4)
                          + m_tiles * (w2c.size * cd + b2f.size * 4)
                          + m_pad * n_pad * od)

    out2d = pl.pallas_call(
        kernel,
        out_shape=jax.ShapeDtypeStruct((m_pad, n_pad), out_dtype),
        grid_spec=pltpu.PrefetchScalarGridSpec(
            num_scalar_prefetch=0,
            grid=grid,
            in_specs=in_specs,
            out_specs=out_specs,
            scratch_shapes=scratch,
        ),
        compiler_params=pltpu.CompilerParams(
            dimension_semantics=dims,
            vmem_limit_bytes=int(vmem_cap),
        ),
        cost_estimate=pl.CostEstimate(flops=int(flops), transcendentals=0,
                                      bytes_accessed=int(bytes_accessed)),
    )(x2d, w1c, b1f, w2c, b2f)

    return out2d[:M, :out_dim].reshape(B, S, out_dim)


def init_params(key, in_dim, h_dim, out_dim, dtype=jnp.float32):
    """Deterministic init mimicking nn.Linear defaults (weights stored transposed)."""
    k1, k2, k3, k4 = jax.random.split(key, 4)
    lim1 = 1.0 / math.sqrt(in_dim)
    lim2 = 1.0 / math.sqrt(h_dim)
    w1 = jax.random.uniform(k1, (in_dim, h_dim), dtype, -lim1, lim1)
    b1 = jax.random.uniform(k2, (h_dim,), dtype, -lim1, lim1)
    w2 = jax.random.uniform(k3, (h_dim, out_dim), dtype, -lim2, lim2)
    b2 = jax.random.uniform(k4, (out_dim,), dtype, -lim2, lim2)
    return w1, b1, w2, b2


def _reference(x, w1, b1, w2, b2):
    hp = jax.lax.Precision.HIGHEST
    h = jnp.maximum(jnp.dot(x, w1, precision=hp) + b1, 0.0)
    return jnp.dot(h, w2, precision=hp) + b2


if __name__ == "__main__":
    key = jax.random.PRNGKey(0)
    kx, kp, kp2 = jax.random.split(key, 3)

    # --- Case A: module defaults (out_d=None -> out_dim=in_dim); auto path ---
    B, S = 2, 8
    in_dim, h_dim = 32, 256
    out_dim = in_dim

    x = jax.random.normal(kx, (B, S, in_dim), jnp.float32)
    w1, b1, w2, b2 = init_params(kp, in_dim, h_dim, out_dim)
    ref = _reference(x, w1, b1, w2, b2)

    # 1) f32 compute path (auto -> weight-resident for these shapes): tight check.
    out_f32 = jax.block_until_ready(
        mlp_transformer(x, w1, b1, w2, b2, compute_dtype=jnp.float32))
    assert out_f32.shape == (B, S, out_dim)
    assert jnp.allclose(out_f32, ref, atol=1e-4, rtol=1e-4)

    # 2) default bf16 compute path (perf config): relaxed tolerance for bf16 rounding.
    out_bf16 = jax.block_until_ready(mlp_transformer(x, w1, b1, w2, b2))
    assert out_bf16.shape == (B, S, out_dim)
    assert jnp.allclose(out_bf16, ref, atol=5e-2, rtol=5e-2)

    # --- Case B: force the streaming kernel (multi k-step and n-tile accumulation) ---
    out_dim_b = 256
    w1b, b1b, w2b, b2b = init_params(kp2, in_dim, h_dim, out_dim_b)
    ref_b = _reference(x, w1b, b1b, w2b, b2b)
    out_stream = jax.block_until_ready(
        mlp_transformer(x, w1b, b1b, w2b, b2b, compute_dtype=jnp.float32,
                        weight_resident=False, tile_h=128, tile_n=128))
    assert out_stream.shape == (B, S, out_dim_b)
    assert jnp.allclose(out_stream, ref_b, atol=1e-4, rtol=1e-4)

    print("KERNEL_OK")
</pallas_src>

<mosaic_0001>
module attributes {stable_mosaic.version = 11 : i64} {
  func.func @_mlp_kernel_resident(%arg0: i32, %arg1: memref<16x32xf32, #tpu.memory_space<vmem>>, %arg2: memref<32x256xf32, #tpu.memory_space<vmem>>, %arg3: memref<1x256xf32, #tpu.memory_space<vmem>>, %arg4: memref<256x128xf32, #tpu.memory_space<vmem>>, %arg5: memref<1x128xf32, #tpu.memory_space<vmem>>, %arg6: memref<16x128xf32, #tpu.memory_space<vmem>>) attributes {dimension_semantics = [#tpu.dimension_semantics<parallel>], iteration_bounds = array<i64: 1>, scalar_prefetch = 0 : i64, scratch_operands = 0 : i64, tpu.core_type = #tpu.core_type<tc>, window_params = [{transform_indices = @transform_0, window_bounds = array<i64: 16, 32>}, {pipeline_mode = #tpu.pipeline_mode<synchronous>, transform_indices = @transform_1, window_bounds = array<i64: 32, 256>}, {pipeline_mode = #tpu.pipeline_mode<synchronous>, transform_indices = @transform_2, window_bounds = array<i64: 1, 256>}, {pipeline_mode = #tpu.pipeline_mode<synchronous>, transform_indices = @transform_3, window_bounds = array<i64: 256, 128>}, {pipeline_mode = #tpu.pipeline_mode<synchronous>, transform_indices = @transform_4, window_bounds = array<i64: 1, 128>}, {transform_indices = @transform_5, window_bounds = array<i64: 16, 128>}]} {
    %c0 = arith.constant 0 : index
    %c0_0 = arith.constant 0 : index
    %0 = vector.load %arg1[%c0, %c0_0] : memref<16x32xf32, #tpu.memory_space<vmem>>, vector<16x32xf32>
    %c0_1 = arith.constant 0 : index
    %c0_2 = arith.constant 0 : index
    %1 = vector.load %arg2[%c0_1, %c0_2] : memref<32x256xf32, #tpu.memory_space<vmem>>, vector<32x256xf32>
    %cst = arith.constant dense<0.000000e+00> : vector<16x256xf32>
    %2 = tpu.matmul %0, %1, %cst {dimension_numbers = #tpu.dot_dimension_numbers<[1], [0], [0], [1], [0, 0, 1, 1], [], []>} : vector<16x32xf32>, vector<32x256xf32>, vector<16x256xf32> -> vector<16x256xf32>
    %c0_3 = arith.constant 0 : index
    %c0_4 = arith.constant 0 : index
    %3 = vector.load %arg3[%c0_3, %c0_4] : memref<1x256xf32, #tpu.memory_space<vmem>>, vector<1x256xf32>
    %4 = vector.broadcast %3 : vector<1x256xf32> to vector<16x256xf32>
    %5 = arith.addf %2, %4 : vector<16x256xf32>
    %cst_5 = arith.constant 0.000000e+00 : f32
    %6 = vector.broadcast %cst_5 : f32 to vector<16x256xf32>
    %7 = arith.maximumf %5, %6 : vector<16x256xf32>
    %c0_6 = arith.constant 0 : index
    %c0_7 = arith.constant 0 : index
    %8 = vector.load %arg4[%c0_6, %c0_7] : memref<256x128xf32, #tpu.memory_space<vmem>>, vector<256x128xf32>
    %cst_8 = arith.constant dense<0.000000e+00> : vector<16x128xf32>
    %9 = tpu.matmul %7, %8, %cst_8 {dimension_numbers = #tpu.dot_dimension_numbers<[1], [0], [0], [1], [0, 0, 1, 1], [], []>} : vector<16x256xf32>, vector<256x128xf32>, vector<16x128xf32> -> vector<16x128xf32>
    %c0_9 = arith.constant 0 : index
    %c0_10 = arith.constant 0 : index
    %10 = vector.load %arg5[%c0_9, %c0_10] : memref<1x128xf32, #tpu.memory_space<vmem>>, vector<1x128xf32>
    %11 = vector.broadcast %10 : vector<1x128xf32> to vector<16x128xf32>
    %12 = arith.addf %9, %11 : vector<16x128xf32>
    %c0_11 = arith.constant 0 : index
    %c0_12 = arith.constant 0 : index
    %13 = vector.load %arg6[%c0_11, %c0_12] : memref<16x128xf32, #tpu.memory_space<vmem>>, vector<16x128xf32>
    tpu.vector_store %arg6[%c0_11, %c0_12], %12 {strides = array<i32>} : memref<16x128xf32, #tpu.memory_space<vmem>>, vector<16x128xf32>,
    return
  }
  func.func @transform_0(%arg0: i32) -> (i32, i32) {
    %c0_i32 = arith.constant 0 : i32
    %c0_i32_0 = arith.constant 0 : i32
    return %arg0, %c0_i32 : i32, i32
  }
  func.func @transform_1(%arg0: i32) -> (i32, i32) {
    %c0_i32 = arith.constant 0 : i32
    %c0_i32_0 = arith.constant 0 : i32
    %c0_i32_1 = arith.constant 0 : i32
    return %c0_i32, %c0_i32_0 : i32, i32
  }
  func.func @transform_2(%arg0: i32) -> (i32, i32) {
    %c0_i32 = arith.constant 0 : i32
    %c0_i32_0 = arith.constant 0 : i32
    %c0_i32_1 = arith.constant 0 : i32
    return %c0_i32, %c0_i32_0 : i32, i32
  }
  func.func @transform_3(%arg0: i32) -> (i32, i32) {
    %c0_i32 = arith.constant 0 : i32
    %c0_i32_0 = arith.constant 0 : i32
    %c0_i32_1 = arith.constant 0 : i32
    return %c0_i32, %c0_i32_0 : i32, i32
  }
  func.func @transform_4(%arg0: i32) -> (i32, i32) {
    %c0_i32 = arith.constant 0 : i32
    %c0_i32_0 = arith.constant 0 : i32
    %c0_i32_1 = arith.constant 0 : i32
    return %c0_i32, %c0_i32_0 : i32, i32
  }
  func.func @transform_5(%arg0: i32) -> (i32, i32) {
    %c0_i32 = arith.constant 0 : i32
    %c0_i32_0 = arith.constant 0 : i32
    return %arg0, %c0_i32 : i32, i32
  }
}

</mosaic_0001>

<llo_original>
// kernel: tpu_custom_call.1
$region0: #{tpu_custom_call.1}
  #allocation0 [shape = 'u32[]', space=smem, size = 0x4, offset = 0x4, fixed_abs, tag = 'smem constant byte address 0x4 - core index']
  #allocation1 [shape = 'u32[144,128]{1,0:T(1,128)}', space=vmem, size = 0x12000, scoped, tag = 'internal scratch']
  %s0 = inlined_call_operand.hbm [shape: f32[16,32], index: 0, kind: input, shape index: {}]
  %s1 = inlined_call_operand.hbm [shape: f32[32,256], index: 1, kind: input, shape index: {}]
  %s2 = inlined_call_operand.vmem [shape: f32[1,256], index: 2, kind: input, shape index: {}]
  %s3 = inlined_call_operand.hbm [shape: f32[256,128], index: 3, kind: input, shape index: {}]
  %s4 = inlined_call_operand.vmem [shape: f32[1,128], index: 4, kind: input, shape index: {}]
  %s5 = inlined_call_operand.hbm [shape: f32[16,128], index: 5, kind: output, shape index: {}]
  %s6 = sld [smem:[#allocation0]]
  $region42: #{tpu_custom_call.1} parent=0
    _
  %s8 = ssub.s32 1, %s6
  %s9 = scalar_select 0, %s8, %s6
  $region1: #{tpu_custom_call.1} parent=0
    #allocation2 [shape = 'u8[8192]{0}', space=vmem, size = 0x2000, scoped, tag = 'input window, operand 0, single buffered']
    #allocation3 [shape = 's32[1]{0}', space=sflag, size = 0x4, scoped, tag = 'scoped memory for tpu_custom_call.1']
    #allocation4 [shape = 's32[1]{0}', space=sflag, size = 0x4, scoped, tag = 'scoped memory for tpu_custom_call.1']
    #allocation5 [shape = 'u8[32768]{0}', space=vmem, size = 0x8000, scoped, tag = 'input window, operand 1, single buffered']
    #allocation6 [shape = 's32[1]{0}', space=sflag, size = 0x4, scoped, tag = 'scoped memory for tpu_custom_call.1']
    #allocation7 [shape = 'u8[131072]{0}', space=vmem, size = 0x20000, scoped, tag = 'input window, operand 3, single buffered']
    #allocation8 [shape = 'u8[8192]{0}', space=vmem, size = 0x2000, scoped, tag = 'output window, operand 0, single buffered']
    %10 = vsyncpa [#allocation3], 0
    %11 = vsyncpa [#allocation6], 0
    %12 = vsyncpa [#allocation4], 0
    // Predicated region
    $region2: #{tpu_custom_call.1} parent=1 // pred_check
      _
    $region3: #{tpu_custom_call.1} parent=1 // pred_check_branch
      %14 = sbr.rel (0) target = $region5
    $region4: #{tpu_custom_call.1} parent=1 // pred_region
      %s16 = ssub.s32 256, 256
      %17 = vsyncadd [#allocation3], %s16
      %s18 = sshll.u32 [#allocation2], 4
      %s19 = int_to_ptr.vmem [resolvable:$true] %s18
      %24 = dma.hbm_to_vmem [thread:$0]  %s0, 256, %s19, [#allocation3], 128, 128, 8
    $region5: #{tpu_custom_call.1} parent=1 // pred_fallthru
      _
    // Predicated region
    $region6: #{tpu_custom_call.1} parent=1 // pred_check
      _
    $region7: #{tpu_custom_call.1} parent=1 // pred_check_branch
      %26 = sbr.rel (0) target = $region9
    $region8: #{tpu_custom_call.1} parent=1 // pred_region
      %s28 = ssub.s32 1024, 1024
      %29 = vsyncadd [#allocation6], %s28
      %s30 = sshll.u32 [#allocation5], 4
      %s31 = int_to_ptr.vmem [resolvable:$true] %s30
      %36 = dma.hbm_to_vmem [thread:$0]  %s1, 1024, %s31, [#allocation6], 256, 256, 16
    $region9: #{tpu_custom_call.1} parent=1 // pred_fallthru
      _
    // Predicated region
    $region10: #{tpu_custom_call.1} parent=1 // pred_check
      _
    $region11: #{tpu_custom_call.1} parent=1 // pred_check_branch
      %38 = sbr.rel (0) target = $region13
    $region12: #{tpu_custom_call.1} parent=1 // pred_region
      _
    $region13: #{tpu_custom_call.1} parent=1 // pred_fallthru
      _
    // Predicated region
    $region14: #{tpu_custom_call.1} parent=1 // pred_check
      _
    $region15: #{tpu_custom_call.1} parent=1 // pred_check_branch
      %40 = sbr.rel (0) target = $region17
    $region16: #{tpu_custom_call.1} parent=1 // pred_region
      %s42 = ssub.s32 4096, 4096
      %43 = vsyncadd [#allocation6], %s42
      %s44 = sshll.u32 [#allocation7], 4
      %s45 = int_to_ptr.vmem [resolvable:$true] %s44
      %50 = dma.hbm_to_vmem [thread:$0]  %s3, 4096, %s45, [#allocation6], 128, 128, 8
    $region17: #{tpu_custom_call.1} parent=1 // pred_fallthru
      _
    // Predicated region
    $region18: #{tpu_custom_call.1} parent=1 // pred_check
      _
    $region19: #{tpu_custom_call.1} parent=1 // pred_check_branch
      %52 = sbr.rel (0) target = $region21
    $region20: #{tpu_custom_call.1} parent=1 // pred_region
      _
    $region21: #{tpu_custom_call.1} parent=1 // pred_fallthru
      _
    // Predicated region
    $region22: #{tpu_custom_call.1} parent=1 // pred_check
      _
    $region23: #{tpu_custom_call.1} parent=1 // pred_check_branch
      %54 = sbr.rel (0) target = $region25
    $region24: #{tpu_custom_call.1} parent=1 // pred_region
      %55 = dma.done [#allocation3], 256
    $region25: #{tpu_custom_call.1} parent=1 // pred_fallthru
      _
    // Predicated region
    $region26: #{tpu_custom_call.1} parent=1 // pred_check
      _
    $region27: #{tpu_custom_call.1} parent=1 // pred_check_branch
      %57 = sbr.rel (0) target = $region29
    $region28: #{tpu_custom_call.1} parent=1 // pred_region
      %58 = dma.done [#allocation6], 1024
    $region29: #{tpu_custom_call.1} parent=1 // pred_fallthru
      _
    // Predicated region
    $region30: #{tpu_custom_call.1} parent=1 // pred_check
      _
    $region31: #{tpu_custom_call.1} parent=1 // pred_check_branch
      %60 = sbr.rel (0) target = $region33
    $region32: #{tpu_custom_call.1} parent=1 // pred_region
      %61 = dma.done [#allocation6], 4096
    $region33: #{tpu_custom_call.1} parent=1 // pred_fallthru
      _
    %v62 = vld [vmem:[#allocation2] sm:$0xff]
    %v63 = vld [vmem:[#allocation2 + $0x8] sm:$0xff]
    %v64 = vld [vmem:[#allocation5] sm:$0xff]
    %v65 = vld [vmem:[#allocation5 + $0x8] sm:$0xff]
    %v66 = vld [vmem:[#allocation5 + $0x10] sm:$0xff]
    %v67 = vld [vmem:[#allocation5 + $0x18] sm:$0xff]
    %v68 = vld [vmem:[#allocation5 + $0x20] sm:$0xff]
    %v69 = vld [vmem:[#allocation5 + $0x28] sm:$0xff]
    %v70 = vld [vmem:[#allocation5 + $0x30] sm:$0xff]
    %v71 = vld [vmem:[#allocation5 + $0x38] sm:$0xff]
    %v72 = vld [vmem:[%s2] sm:$0x3]
    %v74 = vlaneseq
    %v75 = vshrl.u32 %v74, 7
    %v76 = vsub.s32 0, %v75
    %v77 = vrot.slane %v72, %v76
    %v78 = vlaneseq
    %v79 = vshrl.u32 %v78, 7
    %v80 = vsub.s32 1, %v79
    %v81 = vrot.slane %v72, %v80
    %vm84 = vcmask 261120
    %v86 = vsel %vm84, %v62, 0
    %v89 = vsel %vm84, %v63, 0
    %91 = vmatprep.subr.mxu0 %v65
    %92 = vmatpush1.msra.mxu0 %v64
    %93 = vmatprep.subr.mxu0 %v67
    %94 = vmatpush1.msra.mxu0 %v66
    %95 = vmatprep.subr.mxu0 %v69
    %96 = vmatpush1.msra.mxu0 %v68
    %97 = vmatprep.subr.mxu0 %v71
    %98 = vmatpush1.msra.mxu0 %v70
    %99 = vmatprep.subr.mxu0 0.0
    %100 = vmatpush1.msra.mxu0 0.0
    %101 = vmatprep.subr.mxu0 0.0
    %102 = vmatpush1.msra.mxu0 0.0
    %103 = vmatprep.subr.mxu0 0.0
    %104 = vmatpush1.msra.mxu0 0.0
    %105 = vmatprep.subr.mxu0 0.0
    %106 = vmatpush1.msra.mxu0 0.0
    %107 = vmatprep.subr.mxu0 0.0
    %108 = vmatpush1.msra.mxu0 0.0
    %109 = vmatprep.subr.mxu0 0.0
    %110 = vmatpush1.msra.mxu0 0.0
    %111 = vmatprep.subr.mxu0 0.0
    %112 = vmatpush1.msra.mxu0 0.0
    %113 = vmatprep.subr.mxu0 0.0
    %114 = vmatpush1.msra.mxu0 0.0
    %115 = vmatprep.subr.mxu0 0.0
    %116 = vmatpush1.msra.mxu0 0.0
    %117 = vmatprep.subr.mxu0 0.0
    %118 = vmatpush1.msra.mxu0 0.0
    %119 = vmatprep.subr.mxu0 0.0
    %120 = vmatpush1.msra.mxu0 0.0
    %121 = vmatprep.subr.mxu0 0.0
    %122 = vmatpush1.msra.mxu0 0.0
    %123 = vmatprep.subr.mxu0 0.0
    %124 = vmatpush1.msra.mxu0 0.0
    %125 = vmatprep.subr.mxu0 0.0
    %126 = vmatpush1.msra.mxu0 0.0
    %127 = vmatprep.subr.mxu0 0.0
    %128 = vmatpush1.msra.mxu0 0.0
    %129 = vmatprep.subr.mxu0 0.0
    %130 = vmatpush1.msra.mxu0 0.0
    %131 = vmatprep.subr.mxu0 0.0
    %132 = vmatpush1.msra.mxu0 0.0
    %133 = vmatprep.subr.mxu0 0.0
    %134 = vmatpush1.msra.mxu0 0.0
    %135 = vmatprep.subr.mxu0 0.0
    %136 = vmatpush1.msra.mxu0 0.0
    %137 = vmatprep.subr.mxu0 0.0
    %138 = vmatpush1.msra.mxu0 0.0
    %139 = vmatprep.subr.mxu0 0.0
    %140 = vmatpush1.msra.mxu0 0.0
    %141 = vmatprep.subr.mxu0 0.0
    %142 = vmatpush1.msra.mxu0 0.0
    %143 = vmatprep.subr.mxu0 0.0
    %144 = vmatpush1.msra.mxu0 0.0
    %145 = vmatprep.subr.mxu0 0.0
    %146 = vmatpush1.msra.mxu0 0.0
    %147 = vmatprep.subr.mxu0 0.0
    %148 = vmatpush1.msra.mxu0 0.0
    %149 = vmatprep.subr.mxu0 0.0
    %150 = vmatpush1.msra.mxu0 0.0
    %151 = vmatprep.subr.mxu0 0.0
    %152 = vmatpush1.msra.mxu0 0.0
    %153 = vmatprep.subr.mxu0 0.0
    %154 = vmatpush1.msra.mxu0 0.0
    %155 = vmatprep.mubr.f32.mxu0 0.0
    %156 = vmatmul.mubr.f32.gmra.mrb[0].mxu0 %v86
    %v157 = vpop.f32.mrb[0].mxu0
    %v158 = vadd.f32 %v77, %v157
    %v159 = vpop.f32.mrb[0].mxu0
    %v160 = vadd.f32 %v81, %v159
    %161 = vmatprep.mubr.f32.mxu0 0.0
    %162 = vmatmul.mubr.f32.gmra.mrb[0].mxu0 %v89
    %v163 = vpop.f32.mrb[0].mxu0
    %v164 = vadd.f32 %v77, %v163
    %v165 = vpop.f32.mrb[0].mxu0
    %v166 = vadd.f32 %v81, %v165
    %167 = vdwg.mxu0
    %v168 = vmax.f32 %v158, 0.0
    %v169 = vmax.f32 %v160, 0.0
    %v170 = vmax.f32 %v164, 0.0
    %v171 = vmax.f32 %v166, 0.0
    %v172 = vld [vmem:[#allocation7] sm:$0xff]
    %v173 = vld [vmem:[#allocation7 + $0x8] sm:$0xff]
    %v174 = vld [vmem:[#allocation7 + $0x10] sm:$0xff]
    %v175 = vld [vmem:[#allocation7 + $0x18] sm:$0xff]
    %v176 = vld [vmem:[#allocation7 + $0x20] sm:$0xff]
    %v177 = vld [vmem:[#allocation7 + $0x28] sm:$0xff]
    %v178 = vld [vmem:[#allocation7 + $0x30] sm:$0xff]
    %v179 = vld [vmem:[#allocation7 + $0x38] sm:$0xff]
    %v180 = vld [vmem:[#allocation7 + $0x40] sm:$0xff]
    %v181 = vld [vmem:[#allocation7 + $0x48] sm:$0xff]
    %v182 = vld [vmem:[#allocation7 + $0x50] sm:$0xff]
    %v183 = vld [vmem:[#allocation7 + $0x58] sm:$0xff]
    %v184 = vld [vmem:[#allocation7 + $0x60] sm:$0xff]
    %v185 = vld [vmem:[#allocation7 + $0x68] sm:$0xff]
    %v186 = vld [vmem:[#allocation7 + $0x70] sm:$0xff]
    %v187 = vld [vmem:[#allocation7 + $0x78] sm:$0xff]
    %v188 = vld [vmem:[#allocation7 + $0x80] sm:$0xff]
    %v189 = vld [vmem:[#allocation7 + $0x88] sm:$0xff]
    %v190 = vld [vmem:[#allocation7 + $0x90] sm:$0xff]
    %v191 = vld [vmem:[#allocation7 + $0x98] sm:$0xff]
    %v192 = vld [vmem:[#allocation7 + $0xa0] sm:$0xff]
    %v193 = vld [vmem:[#allocation7 + $0xa8] sm:$0xff]
    %v194 = vld [vmem:[#allocation7 + $0xb0] sm:$0xff]
    %v195 = vld [vmem:[#allocation7 + $0xb8] sm:$0xff]
    %v196 = vld [vmem:[#allocation7 + $0xc0] sm:$0xff]
    %v197 = vld [vmem:[#allocation7 + $0xc8] sm:$0xff]
    %v198 = vld [vmem:[#allocation7 + $0xd0] sm:$0xff]
    %v199 = vld [vmem:[#allocation7 + $0xd8] sm:$0xff]
    %v200 = vld [vmem:[#allocation7 + $0xe0] sm:$0xff]
    %v201 = vld [vmem:[#allocation7 + $0xe8] sm:$0xff]
    %v202 = vld [vmem:[#allocation7 + $0xf0] sm:$0xff]
    %v203 = vld [vmem:[#allocation7 + $0xf8] sm:$0xff]
    %v204 = vld [vmem:[%s4] sm:$0x1]
    %v206 = vlaneseq
    %v207 = vshrl.u32 %v206, 7
    %v208 = vsub.s32 0, %v207
    %v209 = vrot.slane %v204, %v208
    %211 = vmatprep.subr.mxu0 0.0
    %212 = vmatpush1.msra.mxu0 %v172
    %213 = vmatprep.subr.mxu0 0.0
    %214 = vmatpush1.msra.mxu0 %v173
    %215 = vmatprep.subr.mxu0 0.0
    %216 = vmatpush1.msra.mxu0 %v174
    %217 = vmatprep.subr.mxu0 0.0
    %218 = vmatpush1.msra.mxu0 %v175
    %219 = vmatprep.subr.mxu0 0.0
    %220 = vmatpush1.msra.mxu0 %v176
    %221 = vmatprep.subr.mxu0 0.0
    %222 = vmatpush1.msra.mxu0 %v177
    %223 = vmatprep.subr.mxu0 0.0
    %224 = vmatpush1.msra.mxu0 %v178
    %225 = vmatprep.subr.mxu0 0.0
    %226 = vmatpush1.msra.mxu0 %v179
    %227 = vmatprep.subr.mxu0 0.0
    %228 = vmatpush1.msra.mxu0 %v180
    %229 = vmatprep.subr.mxu0 0.0
    %230 = vmatpush1.msra.mxu0 %v181
    %231 = vmatprep.subr.mxu0 0.0
    %232 = vmatpush1.msra.mxu0 %v182
    %233 = vmatprep.subr.mxu0 0.0
    %234 = vmatpush1.msra.mxu0 %v183
    %235 = vmatprep.subr.mxu0 0.0
    %236 = vmatpush1.msra.mxu0 %v184
    %237 = vmatprep.subr.mxu0 0.0
    %238 = vmatpush1.msra.mxu0 %v185
    %239 = vmatprep.subr.mxu0 0.0
    %240 = vmatpush1.msra.mxu0 %v186
    %241 = vmatprep.subr.mxu0 0.0
    %242 = vmatpush1.msra.mxu0 %v187
    %243 = vmatprep.subr.mxu0 0.0
    %244 = vmatpush1.msra.mxu0 %v188
    %245 = vmatprep.subr.mxu0 0.0
    %246 = vmatpush1.msra.mxu0 %v189
    %247 = vmatprep.subr.mxu0 0.0
    %248 = vmatpush1.msra.mxu0 %v190
    %249 = vmatprep.subr.mxu0 0.0
    %250 = vmatpush1.msra.mxu0 %v191
    %251 = vmatprep.subr.mxu0 0.0
    %252 = vmatpush1.msra.mxu0 %v192
    %253 = vmatprep.subr.mxu0 0.0
    %254 = vmatpush1.msra.mxu0 %v193
    %255 = vmatprep.subr.mxu0 0.0
    %256 = vmatpush1.msra.mxu0 %v194
    %257 = vmatprep.subr.mxu0 0.0
    %258 = vmatpush1.msra.mxu0 %v195
    %259 = vmatprep.subr.mxu0 0.0
    %260 = vmatpush1.msra.mxu0 %v196
    %261 = vmatprep.subr.mxu0 0.0
    %262 = vmatpush1.msra.mxu0 %v197
    %263 = vmatprep.subr.mxu0 0.0
    %264 = vmatpush1.msra.mxu0 %v198
    %265 = vmatprep.subr.mxu0 0.0
    %266 = vmatpush1.msra.mxu0 %v199
    %267 = vmatprep.subr.mxu0 0.0
    %268 = vmatpush1.msra.mxu0 %v200
    %269 = vmatprep.subr.mxu0 0.0
    %270 = vmatpush1.msra.mxu0 %v201
    %271 = vmatprep.subr.mxu0 0.0
    %272 = vmatpush1.msra.mxu0 %v202
    %273 = vmatprep.subr.mxu0 0.0
    %274 = vmatpush1.msra.mxu0 %v203
    %275 = vmatprep.mubr.f32.mxu0 %v169
    %276 = vmatmul.mubr.f32.gmra.mrb[0].mxu0 %v168
    %v277 = vpop.f32.mrb[0].mxu0
    %v278 = vadd.f32 %v209, %v277
    %v279 = vpop.f32.mrb[0].mxu0
    %280 = vmatprep.mubr.f32.mxu0 %v171
    %281 = vmatmul.mubr.f32.gmra.mrb[0].mxu0 %v170
    %v282 = vpop.f32.mrb[0].mxu0
    %v283 = vadd.f32 %v209, %v282
    %v284 = vpop.f32.mrb[0].mxu0
    %285 = vdwg.mxu0
    %286 = vst [vmem:[#allocation8] sm:$0xff] %v278
    %287 = vst [vmem:[#allocation8 + $0x8] sm:$0xff] %v283
    // Predicated region
    $region34: #{tpu_custom_call.1} parent=1 // pred_check
      _
    $region35: #{tpu_custom_call.1} parent=1 // pred_check_branch
      %289 = sbr.rel (0) target = $region37
    $region36: #{tpu_custom_call.1} parent=1 // pred_region
      %s291 = ssub.s32 256, 256
      %292 = vsyncadd [#allocation4], %s291
      %s293 = sshll.u32 [#allocation8], 4
      %s294 = int_to_ptr.vmem [resolvable:$true] %s293
      %299 = dma.vmem_to_hbm [thread:$0]  %s294, 256, %s5, [#allocation4], 128, 128, 8
    $region37: #{tpu_custom_call.1} parent=1 // pred_fallthru
      _
    // Predicated region
    $region38: #{tpu_custom_call.1} parent=1 // pred_check
      _
    $region39: #{tpu_custom_call.1} parent=1 // pred_check_branch
      %301 = sbr.rel (0) target = $region41
    $region40: #{tpu_custom_call.1} parent=1 // pred_region
      %302 = dma.done [#allocation4], 256
    $region41: #{tpu_custom_call.1} parent=1 // pred_fallthru
      _
    %303 = vsyncpa [#allocation3], 1
    %304 = vsyncpa [#allocation6], 1
    %305 = vsyncpa [#allocation4], 1

</llo_original>
